<compile_context>
chip_gen: v6e
topology: v6e:2x2x1
jax: 0.10.0
libtpu: 0.0.40
codegen_flags: <defaults>
</compile_context>

<pallas_src>
import math

import jax
import jax.numpy as jnp
from jax.experimental import pallas as pl
from jax.experimental.pallas import tpu as pltpu

LANE = 128  # TPU lane width; HBM-bound outputs are padded to a multiple of this.


def _round_up(n, m):
    return ((n + m - 1) // m) * m


def _pad_last(a, target):
    pad = target - a.shape[-1]
    if pad <= 0:
        return a
    widths = [(0, 0)] * (a.ndim - 1) + [(0, pad)]
    return jnp.pad(a, widths)


def _mlp_fused_kernel(x_ref, w1_ref, b1_ref, w2_ref, b2_ref,
                      w3_ref, b3_ref, w4_ref, b4_ref,
                      out_ref, emb_ref):
    """Whole MLP forward on VMEM-resident operands (single grid step)."""
    # Layer 1: Linear(dim, 4*emb) + ReLU   (bf16 matmul, f32 accumulate)
    h = jnp.dot(x_ref[...], w1_ref[...], preferred_element_type=jnp.float32)
    h = jnp.maximum(h + b1_ref[...], 0.0)
    # Layer 2: Linear(4*emb, 2*emb) + ReLU
    h = jnp.dot(h.astype(jnp.bfloat16), w2_ref[...],
                preferred_element_type=jnp.float32)
    h = jnp.maximum(h + b2_ref[...], 0.0)
    # Layer 3: Linear(2*emb, emb) + ReLU  -> penultimate embedding (lane-padded)
    e = jnp.dot(h.astype(jnp.bfloat16), w3_ref[...],
                preferred_element_type=jnp.float32)
    e = jnp.maximum(e + b3_ref[...], 0.0)
    emb_ref[...] = e.astype(emb_ref.dtype)
    # Layer 4: Linear(emb, num_classes), no ReLU -> logits (lane-padded)
    o = jnp.dot(e.astype(jnp.bfloat16), w4_ref[...],
                preferred_element_type=jnp.float32)
    out_ref[...] = (o + b4_ref[...]).astype(out_ref.dtype)


def mlp_forward(x, params):
    """Returns (logits, penultimate_emb), matching MLP.forward semantics."""
    (w1, b1), (w2, b2), (w3, b3), (w4, b4) = params
    dim = w1.shape[0]
    emb = w3.shape[1]
    num_classes = w4.shape[1]

    B = x.shape[0]
    xf = x.reshape(B, dim)                      # x.view(-1, self.dim)

    n3p = _round_up(emb, LANE)                  # lane-dense penultimate width
    n4p = _round_up(num_classes, LANE)          # lane-dense logits width

    # bf16 matmul operands (halves weight DMA bytes, MXU-native); f32 biases.
    xb = xf.astype(jnp.bfloat16)
    w1b = w1.astype(jnp.bfloat16)
    w2b = w2.astype(jnp.bfloat16)
    w3b = _pad_last(w3, n3p).astype(jnp.bfloat16)                 # (2*emb, n3p)
    # Pad w4 rows to match padded emb (padded emb cols are 0 -> no contribution)
    w4b = _pad_last(jnp.pad(w4, ((0, n3p - emb), (0, 0))), n4p
                    ).astype(jnp.bfloat16)                        # (n3p, n4p)
    b1r = b1.reshape(1, -1).astype(jnp.float32)
    b2r = b2.reshape(1, -1).astype(jnp.float32)
    b3r = _pad_last(b3.reshape(1, -1), n3p).astype(jnp.float32)
    b4r = _pad_last(b4.reshape(1, -1), n4p).astype(jnp.float32)

    vmem = pl.BlockSpec(memory_space=pltpu.MemorySpace.VMEM)
    out_pad, emb_pad = pl.pallas_call(
        _mlp_fused_kernel,
        out_shape=(
            jax.ShapeDtypeStruct((B, n4p), jnp.float32),   # padded logits
            jax.ShapeDtypeStruct((B, n3p), jnp.float32),   # padded emb
        ),
        in_specs=[vmem] * 9,
        out_specs=(vmem, vmem),
    )(xb, w1b, b1r, w2b, b2r, w3b, b3r, w4b, b4r)

    return out_pad[:, :num_classes], emb_pad[:, :emb]


def init_mlp_params(key, dim, num_classes=10, emb=256, dtype=jnp.float32):
    """PyTorch-style uniform(-1/sqrt(fan_in), 1/sqrt(fan_in)) init.

    Weights are stored [in, out] (transposed vs. torch's [out, in])."""
    sizes = [
        (dim, emb * 4),
        (emb * 4, emb * 2),
        (emb * 2, emb),
        (emb, num_classes),
    ]
    params = []
    for (fan_in, fan_out) in sizes:
        key, kw, kb = jax.random.split(key, 3)
        bound = 1.0 / math.sqrt(fan_in)
        w = jax.random.uniform(kw, (fan_in, fan_out), dtype, -bound, bound)
        b = jax.random.uniform(kb, (fan_out,), dtype, -bound, bound)
        params.append((w, b))
    return params


def _reference(x, params):
    """Plain-JAX reference with the same bf16-input / f32-accumulate math."""
    (w1, b1), (w2, b2), (w3, b3), (w4, b4) = params
    B = x.shape[0]

    def lin(h, w, b, relu):
        y = jnp.dot(h.astype(jnp.bfloat16), w.astype(jnp.bfloat16),
                    preferred_element_type=jnp.float32) + b.astype(jnp.float32)
        return jnp.maximum(y, 0.0) if relu else y

    h = x.reshape(B, w1.shape[0])
    h = lin(h, w1, b1, True)
    h = lin(h, w2, b2, True)
    e = lin(h, w3, b3, True)
    o = lin(e, w4, b4, False)
    return o, e


if __name__ == "__main__":
    # Small shapes consistent with the module: NCHW image input flattened to dim.
    B, C, H, W = 2, 4, 16, 16
    dim = C * H * W          # 1024
    emb_size = 32
    num_classes = 10

    key = jax.random.PRNGKey(0)
    key, kx = jax.random.split(key)
    x = jax.random.normal(kx, (B, C, H, W), dtype=jnp.float32)
    params = init_mlp_params(key, dim, num_classes=num_classes, emb=emb_size)

    fwd = jax.jit(mlp_forward)
    logits, penult = fwd(x, params)
    jax.block_until_ready((logits, penult))

    ref_logits, ref_emb = _reference(x, params)
    assert logits.shape == (B, num_classes)
    assert penult.shape == (B, emb_size)
    assert jnp.allclose(logits, ref_logits, atol=1e-2, rtol=1e-2)
    assert jnp.allclose(penult, ref_emb, atol=1e-2, rtol=1e-2)

    print("KERNEL_OK")
</pallas_src>

<mosaic_0001>
module attributes {stable_mosaic.version = 11 : i64} {
  func.func @_mlp_fused_kernel(%arg0: memref<2x1024xbf16, #tpu.memory_space<vmem>>, %arg1: memref<1024x128xbf16, #tpu.memory_space<vmem>>, %arg2: memref<1x128xf32, #tpu.memory_space<vmem>>, %arg3: memref<128x64xbf16, #tpu.memory_space<vmem>>, %arg4: memref<1x64xf32, #tpu.memory_space<vmem>>, %arg5: memref<64x128xbf16, #tpu.memory_space<vmem>>, %arg6: memref<1x128xf32, #tpu.memory_space<vmem>>, %arg7: memref<128x128xbf16, #tpu.memory_space<vmem>>, %arg8: memref<1x128xf32, #tpu.memory_space<vmem>>, %arg9: memref<2x128xf32, #tpu.memory_space<vmem>>, %arg10: memref<2x128xf32, #tpu.memory_space<vmem>>) attributes {dimension_semantics = [], scalar_prefetch = 0 : i64, scratch_operands = 0 : i64, tpu.core_type = #tpu.core_type<tc>} {
    %c0 = arith.constant 0 : index
    %c0_0 = arith.constant 0 : index
    %0 = vector.load %arg0[%c0, %c0_0] : memref<2x1024xbf16, #tpu.memory_space<vmem>>, vector<2x1024xbf16>
    %c0_1 = arith.constant 0 : index
    %c0_2 = arith.constant 0 : index
    %1 = vector.load %arg1[%c0_1, %c0_2] : memref<1024x128xbf16, #tpu.memory_space<vmem>>, vector<1024x128xbf16>
    %cst = arith.constant dense<0.000000e+00> : vector<2x128xf32>
    %2 = tpu.matmul %0, %1, %cst {dimension_numbers = #tpu.dot_dimension_numbers<[1], [0], [0], [1], [0, 0, 1, 1], [], []>} : vector<2x1024xbf16>, vector<1024x128xbf16>, vector<2x128xf32> -> vector<2x128xf32>
    %c0_3 = arith.constant 0 : index
    %c0_4 = arith.constant 0 : index
    %3 = vector.load %arg2[%c0_3, %c0_4] : memref<1x128xf32, #tpu.memory_space<vmem>>, vector<1x128xf32>
    %4 = vector.broadcast %3 : vector<1x128xf32> to vector<2x128xf32>
    %5 = arith.addf %2, %4 : vector<2x128xf32>
    %cst_5 = arith.constant 0.000000e+00 : f32
    %6 = vector.broadcast %cst_5 : f32 to vector<2x128xf32>
    %7 = arith.maximumf %5, %6 : vector<2x128xf32>
    %8 = arith.truncf %7 : vector<2x128xf32> to vector<2x128xbf16>
    %c0_6 = arith.constant 0 : index
    %c0_7 = arith.constant 0 : index
    %9 = vector.load %arg3[%c0_6, %c0_7] : memref<128x64xbf16, #tpu.memory_space<vmem>>, vector<128x64xbf16>
    %cst_8 = arith.constant dense<0.000000e+00> : vector<2x64xf32>
    %10 = tpu.matmul %8, %9, %cst_8 {dimension_numbers = #tpu.dot_dimension_numbers<[1], [0], [0], [1], [0, 0, 1, 1], [], []>} : vector<2x128xbf16>, vector<128x64xbf16>, vector<2x64xf32> -> vector<2x64xf32>
    %c0_9 = arith.constant 0 : index
    %c0_10 = arith.constant 0 : index
    %11 = vector.load %arg4[%c0_9, %c0_10] : memref<1x64xf32, #tpu.memory_space<vmem>>, vector<1x64xf32>
    %12 = vector.broadcast %11 : vector<1x64xf32> to vector<2x64xf32>
    %13 = arith.addf %10, %12 : vector<2x64xf32>
    %cst_11 = arith.constant 0.000000e+00 : f32
    %14 = vector.broadcast %cst_11 : f32 to vector<2x64xf32>
    %15 = arith.maximumf %13, %14 : vector<2x64xf32>
    %16 = arith.truncf %15 : vector<2x64xf32> to vector<2x64xbf16>
    %c0_12 = arith.constant 0 : index
    %c0_13 = arith.constant 0 : index
    %17 = vector.load %arg5[%c0_12, %c0_13] : memref<64x128xbf16, #tpu.memory_space<vmem>>, vector<64x128xbf16>
    %cst_14 = arith.constant dense<0.000000e+00> : vector<2x128xf32>
    %18 = tpu.matmul %16, %17, %cst_14 {dimension_numbers = #tpu.dot_dimension_numbers<[1], [0], [0], [1], [0, 0, 1, 1], [], []>} : vector<2x64xbf16>, vector<64x128xbf16>, vector<2x128xf32> -> vector<2x128xf32>
    %c0_15 = arith.constant 0 : index
    %c0_16 = arith.constant 0 : index
    %19 = vector.load %arg6[%c0_15, %c0_16] : memref<1x128xf32, #tpu.memory_space<vmem>>, vector<1x128xf32>
    %20 = vector.broadcast %19 : vector<1x128xf32> to vector<2x128xf32>
    %21 = arith.addf %18, %20 : vector<2x128xf32>
    %cst_17 = arith.constant 0.000000e+00 : f32
    %22 = vector.broadcast %cst_17 : f32 to vector<2x128xf32>
    %23 = arith.maximumf %21, %22 : vector<2x128xf32>
    %c0_18 = arith.constant 0 : index
    %c0_19 = arith.constant 0 : index
    %24 = vector.load %arg10[%c0_18, %c0_19] : memref<2x128xf32, #tpu.memory_space<vmem>>, vector<2x128xf32>
    tpu.vector_store %arg10[%c0_18, %c0_19], %23 {strides = array<i32>} : memref<2x128xf32, #tpu.memory_space<vmem>>, vector<2x128xf32>,
    %25 = arith.truncf %23 : vector<2x128xf32> to vector<2x128xbf16>
    %c0_20 = arith.constant 0 : index
    %c0_21 = arith.constant 0 : index
    %26 = vector.load %arg7[%c0_20, %c0_21] : memref<128x128xbf16, #tpu.memory_space<vmem>>, vector<128x128xbf16>
    %cst_22 = arith.constant dense<0.000000e+00> : vector<2x128xf32>
    %27 = tpu.matmul %25, %26, %cst_22 {dimension_numbers = #tpu.dot_dimension_numbers<[1], [0], [0], [1], [0, 0, 1, 1], [], []>} : vector<2x128xbf16>, vector<128x128xbf16>, vector<2x128xf32> -> vector<2x128xf32>
    %c0_23 = arith.constant 0 : index
    %c0_24 = arith.constant 0 : index
    %28 = vector.load %arg8[%c0_23, %c0_24] : memref<1x128xf32, #tpu.memory_space<vmem>>, vector<1x128xf32>
    %29 = vector.broadcast %28 : vector<1x128xf32> to vector<2x128xf32>
    %30 = arith.addf %27, %29 : vector<2x128xf32>
    %c0_25 = arith.constant 0 : index
    %c0_26 = arith.constant 0 : index
    %31 = vector.load %arg9[%c0_25, %c0_26] : memref<2x128xf32, #tpu.memory_space<vmem>>, vector<2x128xf32>
    tpu.vector_store %arg9[%c0_25, %c0_26], %30 {strides = array<i32>} : memref<2x128xf32, #tpu.memory_space<vmem>>, vector<2x128xf32>,
    return
  }
}

</mosaic_0001>

<llo_original>
// kernel: mlp_forward.1
$region0: #{mlp_forward.1}
  #allocation0 [shape = 'u32[]', space=smem, size = 0x4, offset = 0x4, fixed_abs, tag = 'smem constant byte address 0x4 - core index']
  #allocation1 [shape = 'u32[144,128]{1,0:T(1,128)}', space=vmem, size = 0x12000, scoped, tag = 'internal scratch']
  %s0 = inlined_call_operand.vmem [shape: bf16[2,1024], index: 0, kind: input, shape index: {}]
  %s1 = inlined_call_operand.vmem [shape: bf16[1024,128], index: 1, kind: input, shape index: {}]
  %s2 = inlined_call_operand.vmem [shape: f32[1,128], index: 2, kind: input, shape index: {}]
  %s3 = inlined_call_operand.vmem [shape: bf16[128,64], index: 3, kind: input, shape index: {}]
  %s4 = inlined_call_operand.vmem [shape: f32[1,64], index: 4, kind: input, shape index: {}]
  %s5 = inlined_call_operand.vmem [shape: bf16[64,128], index: 5, kind: input, shape index: {}]
  %s6 = inlined_call_operand.vmem [shape: f32[1,128], index: 6, kind: input, shape index: {}]
  %s7 = inlined_call_operand.vmem [shape: bf16[128,128], index: 7, kind: input, shape index: {}]
  %s8 = inlined_call_operand.vmem [shape: f32[1,128], index: 8, kind: input, shape index: {}]
  %s9 = inlined_call_operand.hbm [shape: f32[2,128], index: 9, kind: output, shape index: {0}]
  %s10 = inlined_call_operand.hbm [shape: f32[2,128], index: 10, kind: output, shape index: {1}]
  %11 = xla_tuple %s9, %s10
  %s12 = sld [smem:[#allocation0]]
  $region54: #{mlp_forward.1} parent=0
    _
  %s14 = ssub.s32 1, %s12
  %s15 = scalar_select 0, %s14, %s12
  $region1: #{mlp_forward.1} parent=0
    #allocation2 [shape = 'u8[1024]{0}', space=vmem, size = 0x400, scoped, tag = 'output window, operand 0, single buffered']
    #allocation3 [shape = 's32[1]{0}', space=sflag, size = 0x4, scoped, tag = 'scoped memory for mlp_forward.1']
    #allocation4 [shape = 'u8[1024]{0}', space=vmem, size = 0x400, scoped, tag = 'output window, operand 1, single buffered']
    #allocation5 [shape = 's32[1]{0}', space=sflag, size = 0x4, scoped, tag = 'scoped memory for mlp_forward.1']
    %16 = vsyncpa [#allocation3], 0
    %17 = vsyncpa [#allocation5], 0
    // Predicated region
    $region2: #{mlp_forward.1} parent=1 // pred_check
      _
    $region3: #{mlp_forward.1} parent=1 // pred_check_branch
      %19 = sbr.rel (0) target = $region5
    $region4: #{mlp_forward.1} parent=1 // pred_region
      _
    $region5: #{mlp_forward.1} parent=1 // pred_fallthru
      _
    // Predicated region
    $region6: #{mlp_forward.1} parent=1 // pred_check
      _
    $region7: #{mlp_forward.1} parent=1 // pred_check_branch
      %21 = sbr.rel (0) target = $region9
    $region8: #{mlp_forward.1} parent=1 // pred_region
      _
    $region9: #{mlp_forward.1} parent=1 // pred_fallthru
      _
    // Predicated region
    $region10: #{mlp_forward.1} parent=1 // pred_check
      _
    $region11: #{mlp_forward.1} parent=1 // pred_check_branch
      %23 = sbr.rel (0) target = $region13
    $region12: #{mlp_forward.1} parent=1 // pred_region
      _
    $region13: #{mlp_forward.1} parent=1 // pred_fallthru
      _
    // Predicated region
    $region14: #{mlp_forward.1} parent=1 // pred_check
      _
    $region15: #{mlp_forward.1} parent=1 // pred_check_branch
      %25 = sbr.rel (0) target = $region17
    $region16: #{mlp_forward.1} parent=1 // pred_region
      _
    $region17: #{mlp_forward.1} parent=1 // pred_fallthru
      _
    // Predicated region
    $region18: #{mlp_forward.1} parent=1 // pred_check
      _
    $region19: #{mlp_forward.1} parent=1 // pred_check_branch
      %27 = sbr.rel (0) target = $region21
    $region20: #{mlp_forward.1} parent=1 // pred_region
      _
    $region21: #{mlp_forward.1} parent=1 // pred_fallthru
      _
    // Predicated region
    $region22: #{mlp_forward.1} parent=1 // pred_check
      _
    $region23: #{mlp_forward.1} parent=1 // pred_check_branch
      %29 = sbr.rel (0) target = $region25
    $region24: #{mlp_forward.1} parent=1 // pred_region
      _
    $region25: #{mlp_forward.1} parent=1 // pred_fallthru
      _
    // Predicated region
    $region26: #{mlp_forward.1} parent=1 // pred_check
      _
    $region27: #{mlp_forward.1} parent=1 // pred_check_branch
      %31 = sbr.rel (0) target = $region29
    $region28: #{mlp_forward.1} parent=1 // pred_region
      _
    $region29: #{mlp_forward.1} parent=1 // pred_fallthru
      _
    // Predicated region
    $region30: #{mlp_forward.1} parent=1 // pred_check
      _
    $region31: #{mlp_forward.1} parent=1 // pred_check_branch
      %33 = sbr.rel (0) target = $region33
    $region32: #{mlp_forward.1} parent=1 // pred_region
      _
    $region33: #{mlp_forward.1} parent=1 // pred_fallthru
      _
    // Predicated region
    $region34: #{mlp_forward.1} parent=1 // pred_check
      _
    $region35: #{mlp_forward.1} parent=1 // pred_check_branch
      %35 = sbr.rel (0) target = $region37
    $region36: #{mlp_forward.1} parent=1 // pred_region
      _
    $region37: #{mlp_forward.1} parent=1 // pred_fallthru
      _
    %v37 = vld [vmem:[%s0] sm:$0xff]
    %v38 = vld [vmem:[%s1] sm:$0xf]
    %v39 = vld [vmem:[%s1 + $0x4] sm:$0xf]
    %v40 = vld [vmem:[%s1 + $0x8] sm:$0xf]
    %v41 = vld [vmem:[%s1 + $0xc] sm:$0xf]
    %v42 = vld [vmem:[%s1 + $0x10] sm:$0xf]
    %v43 = vld [vmem:[%s1 + $0x14] sm:$0xf]
    %v44 = vld [vmem:[%s1 + $0x18] sm:$0xf]
    %v45 = vld [vmem:[%s1 + $0x1c] sm:$0xf]
    %v46 = vld [vmem:[%s1 + $0x20] sm:$0xf]
    %v47 = vld [vmem:[%s1 + $0x24] sm:$0xf]
    %v48 = vld [vmem:[%s1 + $0x28] sm:$0xf]
    %v49 = vld [vmem:[%s1 + $0x2c] sm:$0xf]
    %v50 = vld [vmem:[%s1 + $0x30] sm:$0xf]
    %v51 = vld [vmem:[%s1 + $0x34] sm:$0xf]
    %v52 = vld [vmem:[%s1 + $0x38] sm:$0xf]
    %v53 = vld [vmem:[%s1 + $0x3c] sm:$0xf]
    %v54 = vld [vmem:[%s1 + $0x40] sm:$0xf]
    %v55 = vld [vmem:[%s1 + $0x44] sm:$0xf]
    %v56 = vld [vmem:[%s1 + $0x48] sm:$0xf]
    %v57 = vld [vmem:[%s1 + $0x4c] sm:$0xf]
    %v58 = vld [vmem:[%s1 + $0x50] sm:$0xf]
    %v59 = vld [vmem:[%s1 + $0x54] sm:$0xf]
    %v60 = vld [vmem:[%s1 + $0x58] sm:$0xf]
    %v61 = vld [vmem:[%s1 + $0x5c] sm:$0xf]
    %v62 = vld [vmem:[%s1 + $0x60] sm:$0xf]
    %v63 = vld [vmem:[%s1 + $0x64] sm:$0xf]
    %v64 = vld [vmem:[%s1 + $0x68] sm:$0xf]
    %v65 = vld [vmem:[%s1 + $0x6c] sm:$0xf]
    %v66 = vld [vmem:[%s1 + $0x70] sm:$0xf]
    %v67 = vld [vmem:[%s1 + $0x74] sm:$0xf]
    %v68 = vld [vmem:[%s1 + $0x78] sm:$0xf]
    %v69 = vld [vmem:[%s1 + $0x7c] sm:$0xf]
    %v70 = vld [vmem:[%s1 + $0x80] sm:$0xf]
    %v71 = vld [vmem:[%s1 + $0x84] sm:$0xf]
    %v72 = vld [vmem:[%s1 + $0x88] sm:$0xf]
    %v73 = vld [vmem:[%s1 + $0x8c] sm:$0xf]
    %v74 = vld [vmem:[%s1 + $0x90] sm:$0xf]
    %v75 = vld [vmem:[%s1 + $0x94] sm:$0xf]
    %v76 = vld [vmem:[%s1 + $0x98] sm:$0xf]
    %v77 = vld [vmem:[%s1 + $0x9c] sm:$0xf]
    %v78 = vld [vmem:[%s1 + $0xa0] sm:$0xf]
    %v79 = vld [vmem:[%s1 + $0xa4] sm:$0xf]
    %v80 = vld [vmem:[%s1 + $0xa8] sm:$0xf]
    %v81 = vld [vmem:[%s1 + $0xac] sm:$0xf]
    %v82 = vld [vmem:[%s1 + $0xb0] sm:$0xf]
    %v83 = vld [vmem:[%s1 + $0xb4] sm:$0xf]
    %v84 = vld [vmem:[%s1 + $0xb8] sm:$0xf]
    %v85 = vld [vmem:[%s1 + $0xbc] sm:$0xf]
    %v86 = vld [vmem:[%s1 + $0xc0] sm:$0xf]
    %v87 = vld [vmem:[%s1 + $0xc4] sm:$0xf]
    %v88 = vld [vmem:[%s1 + $0xc8] sm:$0xf]
    %v89 = vld [vmem:[%s1 + $0xcc] sm:$0xf]
    %v90 = vld [vmem:[%s1 + $0xd0] sm:$0xf]
    %v91 = vld [vmem:[%s1 + $0xd4] sm:$0xf]
    %v92 = vld [vmem:[%s1 + $0xd8] sm:$0xf]
    %v93 = vld [vmem:[%s1 + $0xdc] sm:$0xf]
    %v94 = vld [vmem:[%s1 + $0xe0] sm:$0xf]
    %v95 = vld [vmem:[%s1 + $0xe4] sm:$0xf]
    %v96 = vld [vmem:[%s1 + $0xe8] sm:$0xf]
    %v97 = vld [vmem:[%s1 + $0xec] sm:$0xf]
    %v98 = vld [vmem:[%s1 + $0xf0] sm:$0xf]
    %v99 = vld [vmem:[%s1 + $0xf4] sm:$0xf]
    %v100 = vld [vmem:[%s1 + $0xf8] sm:$0xf]
    %v101 = vld [vmem:[%s1 + $0xfc] sm:$0xf]
    %v102 = vld [vmem:[%s1 + $0x100] sm:$0xf]
    %v103 = vld [vmem:[%s1 + $0x104] sm:$0xf]
    %v104 = vld [vmem:[%s1 + $0x108] sm:$0xf]
    %v105 = vld [vmem:[%s1 + $0x10c] sm:$0xf]
    %v106 = vld [vmem:[%s1 + $0x110] sm:$0xf]
    %v107 = vld [vmem:[%s1 + $0x114] sm:$0xf]
    %v108 = vld [vmem:[%s1 + $0x118] sm:$0xf]
    %v109 = vld [vmem:[%s1 + $0x11c] sm:$0xf]
    %v110 = vld [vmem:[%s1 + $0x120] sm:$0xf]
    %v111 = vld [vmem:[%s1 + $0x124] sm:$0xf]
    %v112 = vld [vmem:[%s1 + $0x128] sm:$0xf]
    %v113 = vld [vmem:[%s1 + $0x12c] sm:$0xf]
    %v114 = vld [vmem:[%s1 + $0x130] sm:$0xf]
    %v115 = vld [vmem:[%s1 + $0x134] sm:$0xf]
    %v116 = vld [vmem:[%s1 + $0x138] sm:$0xf]
    %v117 = vld [vmem:[%s1 + $0x13c] sm:$0xf]
    %v118 = vld [vmem:[%s1 + $0x140] sm:$0xf]
    %v119 = vld [vmem:[%s1 + $0x144] sm:$0xf]
    %v120 = vld [vmem:[%s1 + $0x148] sm:$0xf]
    %v121 = vld [vmem:[%s1 + $0x14c] sm:$0xf]
    %v122 = vld [vmem:[%s1 + $0x150] sm:$0xf]
    %v123 = vld [vmem:[%s1 + $0x154] sm:$0xf]
    %v124 = vld [vmem:[%s1 + $0x158] sm:$0xf]
    %v125 = vld [vmem:[%s1 + $0x15c] sm:$0xf]
    %v126 = vld [vmem:[%s1 + $0x160] sm:$0xf]
    %v127 = vld [vmem:[%s1 + $0x164] sm:$0xf]
    %v128 = vld [vmem:[%s1 + $0x168] sm:$0xf]
    %v129 = vld [vmem:[%s1 + $0x16c] sm:$0xf]
    %v130 = vld [vmem:[%s1 + $0x170] sm:$0xf]
    %v131 = vld [vmem:[%s1 + $0x174] sm:$0xf]
    %v132 = vld [vmem:[%s1 + $0x178] sm:$0xf]
    %v133 = vld [vmem:[%s1 + $0x17c] sm:$0xf]
    %v134 = vld [vmem:[%s1 + $0x180] sm:$0xf]
    %v135 = vld [vmem:[%s1 + $0x184] sm:$0xf]
    %v136 = vld [vmem:[%s1 + $0x188] sm:$0xf]
    %v137 = vld [vmem:[%s1 + $0x18c] sm:$0xf]
    %v138 = vld [vmem:[%s1 + $0x190] sm:$0xf]
    %v139 = vld [vmem:[%s1 + $0x194] sm:$0xf]
    %v140 = vld [vmem:[%s1 + $0x198] sm:$0xf]
    %v141 = vld [vmem:[%s1 + $0x19c] sm:$0xf]
    %v142 = vld [vmem:[%s1 + $0x1a0] sm:$0xf]
    %v143 = vld [vmem:[%s1 + $0x1a4] sm:$0xf]
    %v144 = vld [vmem:[%s1 + $0x1a8] sm:$0xf]
    %v145 = vld [vmem:[%s1 + $0x1ac] sm:$0xf]
    %v146 = vld [vmem:[%s1 + $0x1b0] sm:$0xf]
    %v147 = vld [vmem:[%s1 + $0x1b4] sm:$0xf]
    %v148 = vld [vmem:[%s1 + $0x1b8] sm:$0xf]
    %v149 = vld [vmem:[%s1 + $0x1bc] sm:$0xf]
    %v150 = vld [vmem:[%s1 + $0x1c0] sm:$0xf]
    %v151 = vld [vmem:[%s1 + $0x1c4] sm:$0xf]
    %v152 = vld [vmem:[%s1 + $0x1c8] sm:$0xf]
    %v153 = vld [vmem:[%s1 + $0x1cc] sm:$0xf]
    %v154 = vld [vmem:[%s1 + $0x1d0] sm:$0xf]
    %v155 = vld [vmem:[%s1 + $0x1d4] sm:$0xf]
    %v156 = vld [vmem:[%s1 + $0x1d8] sm:$0xf]
    %v157 = vld [vmem:[%s1 + $0x1dc] sm:$0xf]
    %v158 = vld [vmem:[%s1 + $0x1e0] sm:$0xf]
    %v159 = vld [vmem:[%s1 + $0x1e4] sm:$0xf]
    %v160 = vld [vmem:[%s1 + $0x1e8] sm:$0xf]
    %v161 = vld [vmem:[%s1 + $0x1ec] sm:$0xf]
    %v162 = vld [vmem:[%s1 + $0x1f0] sm:$0xf]
    %v163 = vld [vmem:[%s1 + $0x1f4] sm:$0xf]
    %v164 = vld [vmem:[%s1 + $0x1f8] sm:$0xf]
    %v165 = vld [vmem:[%s1 + $0x1fc] sm:$0xf]
    %v166 = vld [vmem:[%s2] sm:$0x1]
    %v168 = vlaneseq
    %v169 = vshrl.u32 %v168, 7
    %v170 = vsub.s32 0, %v169
    %v171 = vrot.slane %v166, %v170
    %v174 = vcombine.high %v37, %v37
    %v176 = vunpack.c.l.s4 1966171168
    %v177 = vunpack.c.0.s8 %v176
    %v178 = vlaneseq
    %v179 = vshrl.u32 %v178, 7
    %v180 = vsub.s32 %v177, %v179
    %v181 = vrot.slane %v37, %v180
    %v183 = vunpack.c.l.s4 1966171168
    %v184 = vunpack.c.0.s8 %v183
    %v185 = vlaneseq
    %v186 = vshrl.u32 %v185, 7
    %v187 = vsub.s32 %v184, %v186
    %v188 = vrot.slane %v174, %v187
    %v189 = vcombine.high %v181, %v181
    %v190 = vcombine.high %v188, %v188
    %v192 = vunpack.c.l.s4 1966171168
    %v193 = vunpack.c.0.s8 %v192
    %v194 = vlaneseq
    %v195 = vshrl.u32 %v194, 7
    %v196 = vsub.s32 %v193, %v195
    %v197 = vrot.slane %v181, %v196
    %v199 = vunpack.c.l.s4 1966171168
    %v200 = vunpack.c.0.s8 %v199
    %v201 = vlaneseq
    %v202 = vshrl.u32 %v201, 7
    %v203 = vsub.s32 %v200, %v202
    %v204 = vrot.slane %v188, %v203
    %v206 = vunpack.c.l.s4 1966171168
    %v207 = vunpack.c.0.s8 %v206
    %v208 = vlaneseq
    %v209 = vshrl.u32 %v208, 7
    %v210 = vsub.s32 %v207, %v209
    %v211 = vrot.slane %v189, %v210
    %v213 = vunpack.c.l.s4 1966171168
    %v214 = vunpack.c.0.s8 %v213
    %v215 = vlaneseq
    %v216 = vshrl.u32 %v215, 7
    %v217 = vsub.s32 %v214, %v216
    %v218 = vrot.slane %v190, %v217
    %v219 = vcombine.high %v197, %v197
    %v220 = vcombine.high %v204, %v204
    %v221 = vcombine.high %v211, %v211
    %v222 = vcombine.high %v218, %v218
    %v359 = vunpack.c.l.b16 %v38
    %v360 = vunpack.c.l.b16 %v39
    %v361 = vunpack.c.l.b16 %v40
    %v362 = vunpack.c.l.b16 %v41
    %v363 = vunpack.c.l.b16 %v42
    %v364 = vunpack.c.l.b16 %v43
    %v365 = vunpack.c.l.b16 %v44
    %v366 = vunpack.c.l.b16 %v45
    %v367 = vunpack.c.l.b16 %v46
    %v368 = vunpack.c.l.b16 %v47
    %v369 = vunpack.c.l.b16 %v48
    %v370 = vunpack.c.l.b16 %v49
    %v371 = vunpack.c.l.b16 %v50
    %v372 = vunpack.c.l.b16 %v51
    %v373 = vunpack.c.l.b16 %v52
    %v374 = vunpack.c.l.b16 %v53
    %v375 = vunpack.c.l.b16 %v54
    %v376 = vunpack.c.l.b16 %v55
    %v377 = vunpack.c.l.b16 %v56
    %v378 = vunpack.c.l.b16 %v57
    %v379 = vunpack.c.l.b16 %v58
    %v380 = vunpack.c.l.b16 %v59
    %v381 = vunpack.c.l.b16 %v60
    %v382 = vunpack.c.l.b16 %v61
    %v383 = vunpack.c.l.b16 %v62
    %v384 = vunpack.c.l.b16 %v63
    %v385 = vunpack.c.l.b16 %v64
    %v386 = vunpack.c.l.b16 %v65
    %v387 = vunpack.c.l.b16 %v66
    %v388 = vunpack.c.l.b16 %v67
    %v389 = vunpack.c.l.b16 %v68
    %v390 = vunpack.c.l.b16 %v69
    %v391 = vunpack.c.l.b16 %v70
    %v392 = vunpack.c.l.b16 %v71
    %v393 = vunpack.c.l.b16 %v72
    %v394 = vunpack.c.l.b16 %v73
    %v395 = vunpack.c.l.b16 %v74
    %v396 = vunpack.c.l.b16 %v75
    %v397 = vunpack.c.l.b16 %v76
    %v398 = vunpack.c.l.b16 %v77
    %v399 = vunpack.c.l.b16 %v78
    %v400 = vunpack.c.l.b16 %v79
    %v401 = vunpack.c.l.b16 %v80
    %v402 = vunpack.c.l.b16 %v81
    %v403 = vunpack.c.l.b16 %v82
    %v404 = vunpack.c.l.b16 %v83
    %v405 = vunpack.c.l.b16 %v84
    %v406 = vunpack.c.l.b16 %v85
    %v407 = vunpack.c.l.b16 %v86
    %v408 = vunpack.c.l.b16 %v87
    %v409 = vunpack.c.l.b16 %v88
    %v410 = vunpack.c.l.b16 %v89
    %v411 = vunpack.c.l.b16 %v90
    %v412 = vunpack.c.l.b16 %v91
    %v413 = vunpack.c.l.b16 %v92
    %v414 = vunpack.c.l.b16 %v93
    %v415 = vunpack.c.l.b16 %v94
    %v416 = vunpack.c.l.b16 %v95
    %v417 = vunpack.c.l.b16 %v96
    %v418 = vunpack.c.l.b16 %v97
    %v419 = vunpack.c.l.b16 %v98
    %v420 = vunpack.c.l.b16 %v99
    %v421 = vunpack.c.l.b16 %v100
    %v422 = vunpack.c.l.b16 %v101
    %v423 = vunpack.c.l.b16 %v102
    %v424 = vunpack.c.l.b16 %v103
    %v425 = vunpack.c.l.b16 %v104
    %v426 = vunpack.c.l.b16 %v105
    %v427 = vunpack.c.l.b16 %v106
    %v428 = vunpack.c.l.b16 %v107
    %v429 = vunpack.c.l.b16 %v108
    %v430 = vunpack.c.l.b16 %v109
    %v431 = vunpack.c.l.b16 %v110
    %v432 = vunpack.c.l.b16 %v111
    %v433 = vunpack.c.l.b16 %v112
    %v434 = vunpack.c.l.b16 %v113
    %v435 = vunpack.c.l.b16 %v114
    %v436 = vunpack.c.l.b16 %v115
    %v437 = vunpack.c.l.b16 %v116
    %v438 = vunpack.c.l.b16 %v117
    %v439 = vunpack.c.l.b16 %v118
    %v440 = vunpack.c.l.b16 %v119
    %v441 = vunpack.c.l.b16 %v120
    %v442 = vunpack.c.l.b16 %v121
    %v443 = vunpack.c.l.b16 %v122
    %v444 = vunpack.c.l.b16 %v123
    %v445 = vunpack.c.l.b16 %v124
    %v446 = vunpack.c.l.b16 %v125
    %v447 = vunpack.c.l.b16 %v126
    %v448 = vunpack.c.l.b16 %v127
    %v449 = vunpack.c.l.b16 %v128
    %v450 = vunpack.c.l.b16 %v129
    %v451 = vunpack.c.l.b16 %v130
    %v452 = vunpack.c.l.b16 %v131
    %v453 = vunpack.c.l.b16 %v132
    %v454 = vunpack.c.l.b16 %v133
    %v455 = vunpack.c.l.b16 %v134
    %v456 = vunpack.c.l.b16 %v135
    %v457 = vunpack.c.l.b16 %v136
    %v458 = vunpack.c.l.b16 %v137
    %v459 = vunpack.c.l.b16 %v138
    %v460 = vunpack.c.l.b16 %v139
    %v461 = vunpack.c.l.b16 %v140
    %v462 = vunpack.c.l.b16 %v141
    %v463 = vunpack.c.l.b16 %v142
    %v464 = vunpack.c.l.b16 %v143
    %v465 = vunpack.c.l.b16 %v144
    %v466 = vunpack.c.l.b16 %v145
    %v467 = vunpack.c.l.b16 %v146
    %v468 = vunpack.c.l.b16 %v147
    %v469 = vunpack.c.l.b16 %v148
    %v470 = vunpack.c.l.b16 %v149
    %v471 = vunpack.c.l.b16 %v150
    %v472 = vunpack.c.l.b16 %v151
    %v473 = vunpack.c.l.b16 %v152
    %v474 = vunpack.c.l.b16 %v153
    %v475 = vunpack.c.l.b16 %v154
    %v476 = vunpack.c.l.b16 %v155
    %v477 = vunpack.c.l.b16 %v156
    %v478 = vunpack.c.l.b16 %v157
    %v479 = vunpack.c.l.b16 %v158
    %v480 = vunpack.c.l.b16 %v159
    %v481 = vunpack.c.l.b16 %v160
    %v482 = vunpack.c.l.b16 %v161
    %v483 = vunpack.c.l.b16 %v162
    %v484 = vunpack.c.l.b16 %v163
    %v485 = vunpack.c.l.b16 %v164
    %v486 = vunpack.c.l.b16 %v165
    %v487 = vpack.c.b16 %v360, %v359
    %v488 = vpack.c.b16 %v362, %v361
    %v489 = vpack.c.b16 %v364, %v363
    %v490 = vpack.c.b16 %v366, %v365
    %v491 = vpack.c.b16 %v368, %v367
    %v492 = vpack.c.b16 %v370, %v369
    %v493 = vpack.c.b16 %v372, %v371
    %v494 = vpack.c.b16 %v374, %v373
    %v495 = vpack.c.b16 %v376, %v375
    %v496 = vpack.c.b16 %v378, %v377
    %v497 = vpack.c.b16 %v380, %v379
    %v498 = vpack.c.b16 %v382, %v381
    %v499 = vpack.c.b16 %v384, %v383
    %v500 = vpack.c.b16 %v386, %v385
    %v501 = vpack.c.b16 %v388, %v387
    %v502 = vpack.c.b16 %v390, %v389
    %v503 = vpack.c.b16 %v392, %v391
    %v504 = vpack.c.b16 %v394, %v393
    %v505 = vpack.c.b16 %v396, %v395
    %v506 = vpack.c.b16 %v398, %v397
    %v507 = vpack.c.b16 %v400, %v399
    %v508 = vpack.c.b16 %v402, %v401
    %v509 = vpack.c.b16 %v404, %v403
    %v510 = vpack.c.b16 %v406, %v405
    %v511 = vpack.c.b16 %v408, %v407
    %v512 = vpack.c.b16 %v410, %v409
    %v513 = vpack.c.b16 %v412, %v411
    %v514 = vpack.c.b16 %v414, %v413
    %v515 = vpack.c.b16 %v416, %v415
    %v516 = vpack.c.b16 %v418, %v417
    %v517 = vpack.c.b16 %v420, %v419
    %v518 = vpack.c.b16 %v422, %v421
    %v519 = vpack.c.b16 %v424, %v423
    %v520 = vpack.c.b16 %v426, %v425
    %v521 = vpack.c.b16 %v428, %v427
    %v522 = vpack.c.b16 %v430, %v429
    %v523 = vpack.c.b16 %v432, %v431
    %v524 = vpack.c.b16 %v434, %v433
    %v525 = vpack.c.b16 %v436, %v435
    %v526 = vpack.c.b16 %v438, %v437
    %v527 = vpack.c.b16 %v440, %v439
    %v528 = vpack.c.b16 %v442, %v441
    %v529 = vpack.c.b16 %v444, %v443
    %v530 = vpack.c.b16 %v446, %v445
    %v531 = vpack.c.b16 %v448, %v447
    %v532 = vpack.c.b16 %v450, %v449
    %v533 = vpack.c.b16 %v452, %v451
    %v534 = vpack.c.b16 %v454, %v453
    %v535 = vpack.c.b16 %v456, %v455
    %v536 = vpack.c.b16 %v458, %v457
    %v537 = vpack.c.b16 %v460, %v459
    %v538 = vpack.c.b16 %v462, %v461
    %v539 = vpack.c.b16 %v464, %v463
    %v540 = vpack.c.b16 %v466, %v465
    %v541 = vpack.c.b16 %v468, %v467
    %v542 = vpack.c.b16 %v470, %v469
    %v543 = vpack.c.b16 %v472, %v471
    %v544 = vpack.c.b16 %v474, %v473
    %v545 = vpack.c.b16 %v476, %v475
    %v546 = vpack.c.b16 %v478, %v477
    %v547 = vpack.c.b16 %v480, %v479
    %v548 = vpack.c.b16 %v482, %v481
    %v549 = vpack.c.b16 %v484, %v483
    %v550 = vpack.c.b16 %v486, %v485
    %615 = vmatprep.subr.bf16.mxu0 0
    %616 = vmatpush1.bf16.msra.mxu0 %v494
    %617 = vmatprep.subr.bf16.mxu0 0
    %618 = vmatpush1.bf16.msra.mxu0 %v493
    %619 = vmatprep.subr.bf16.mxu0 0
    %620 = vmatpush1.bf16.msra.mxu0 %v492
    %621 = vmatprep.subr.bf16.mxu0 0
    %622 = vmatpush1.bf16.msra.mxu0 %v491
    %623 = vmatprep.subr.bf16.mxu0 0
    %624 = vmatpush1.bf16.msra.mxu0 %v490
    %625 = vmatprep.subr.bf16.mxu0 0
    %626 = vmatpush1.bf16.msra.mxu0 %v489
    %627 = vmatprep.subr.bf16.mxu0 0
    %628 = vmatpush1.bf16.msra.mxu0 %v488
    %629 = vmatprep.subr.bf16.mxu0 0
    %630 = vmatpush1.bf16.msra.mxu0 %v487
    %631 = vmatprep.subr.bf16.mxu0 0
    %632 = vmatpush2.bf16.msra.mxu0 %v502
    %633 = vmatprep.subr.bf16.mxu0 0
    %634 = vmatpush2.bf16.msra.mxu0 %v501
    %635 = vmatprep.subr.bf16.mxu0 0
    %636 = vmatpush2.bf16.msra.mxu0 %v500
    %637 = vmatprep.subr.bf16.mxu0 0
    %638 = vmatpush2.bf16.msra.mxu0 %v499
    %639 = vmatprep.subr.bf16.mxu0 0
    %640 = vmatpush2.bf16.msra.mxu0 %v498
    %641 = vmatprep.subr.bf16.mxu0 0
    %642 = vmatpush2.bf16.msra.mxu0 %v497
    %643 = vmatprep.subr.bf16.mxu0 0
    %644 = vmatpush2.bf16.msra.mxu0 %v496
    %645 = vmatprep.subr.bf16.mxu0 0
    %646 = vmatpush2.bf16.msra.mxu0 %v495
    %647 = vmatprep.mubr.bf16.mxu0 %v211
    %648 = vmatmul.mubr.bf16.gmra.mxu0 %v197
    %v649 = vpop.f32.mrf.mxu0
    %v650 = vadd.f32 %v171, %v649
    %v651 = vpop.f32.mrf.mxu0
    %v652 = vpop.f32.mrf.mxu0
    %v653 = vpop.f32.mrf.mxu0
    %654 = vdwg.mxu0
    %655 = vmatprep.subr.bf16.mxu0 0
    %656 = vmatpush1.bf16.msra.mxu0 %v510
    %657 = vmatprep.subr.bf16.mxu0 0
    %658 = vmatpush1.bf16.msra.mxu0 %v509
    %659 = vmatprep.subr.bf16.mxu0 0
    %660 = vmatpush1.bf16.msra.mxu0 %v508
    %661 = vmatprep.subr.bf16.mxu0 0
    %662 = vmatpush1.bf16.msra.mxu0 %v507
    %663 = vmatprep.subr.bf16.mxu0 0
    %664 = vmatpush1.bf16.msra.mxu0 %v506
    %665 = vmatprep.subr.bf16.mxu0 0
    %666 = vmatpush1.bf16.msra.mxu0 %v505
    %667 = vmatprep.subr.bf16.mxu0 0
    %668 = vmatpush1.bf16.msra.mxu0 %v504
    %669 = vmatprep.subr.bf16.mxu0 0
    %670 = vmatpush1.bf16.msra.mxu0 %v503
    %671 = vmatprep.subr.bf16.mxu0 0
    %672 = vmatpush2.bf16.msra.mxu0 %v518
    %673 = vmatprep.subr.bf16.mxu0 0
    %674 = vmatpush2.bf16.msra.mxu0 %v517
    %675 = vmatprep.subr.bf16.mxu0 0
    %676 = vmatpush2.bf16.msra.mxu0 %v516
    %677 = vmatprep.subr.bf16.mxu0 0
    %678 = vmatpush2.bf16.msra.mxu0 %v515
    %679 = vmatprep.subr.bf16.mxu0 0
    %680 = vmatpush2.bf16.msra.mxu0 %v514
    %681 = vmatprep.subr.bf16.mxu0 0
    %682 = vmatpush2.bf16.msra.mxu0 %v513
    %683 = vmatprep.subr.bf16.mxu0 0
    %684 = vmatpush2.bf16.msra.mxu0 %v512
    %685 = vmatprep.subr.bf16.mxu0 0
    %686 = vmatpush2.bf16.msra.mxu0 %v511
    %687 = vmatprep.mubr.bf16.mxu0 %v221
    %688 = vmatmul.mubr.bf16.gmra.mxu0 %v219
    %v689 = vpop.f32.mrf.mxu0
    %v690 = vadd.f32 %v650, %v689
    %v691 = vpop.f32.mrf.mxu0
    %v692 = vpop.f32.mrf.mxu0
    %v693 = vpop.f32.mrf.mxu0
    %694 = vdwg.mxu0
    %695 = vmatprep.subr.bf16.mxu0 0
    %696 = vmatpush1.bf16.msra.mxu0 %v526
    %697 = vmatprep.subr.bf16.mxu0 0
    %698 = vmatpush1.bf16.msra.mxu0 %v525
    %699 = vmatprep.subr.bf16.mxu0 0
    %700 = vmatpush1.bf16.msra.mxu0 %v524
    %701 = vmatprep.subr.bf16.mxu0 0
    %702 = vmatpush1.bf16.msra.mxu0 %v523
    %703 = vmatprep.subr.bf16.mxu0 0
    %704 = vmatpush1.bf16.msra.mxu0 %v522
    %705 = vmatprep.subr.bf16.mxu0 0
    %706 = vmatpush1.bf16.msra.mxu0 %v521
    %707 = vmatprep.subr.bf16.mxu0 0
    %708 = vmatpush1.bf16.msra.mxu0 %v520
    %709 = vmatprep.subr.bf16.mxu0 0
    %710 = vmatpush1.bf16.msra.mxu0 %v519
    %711 = vmatprep.subr.bf16.mxu0 0
    %712 = vmatpush2.bf16.msra.mxu0 %v534
    %713 = vmatprep.subr.bf16.mxu0 0
    %714 = vmatpush2.bf16.msra.mxu0 %v533
    %715 = vmatprep.subr.bf16.mxu0 0
    %716 = vmatpush2.bf16.msra.mxu0 %v532
    %717 = vmatprep.subr.bf16.mxu0 0
    %718 = vmatpush2.bf16.msra.mxu0 %v531
    %719 = vmatprep.subr.bf16.mxu0 0
    %720 = vmatpush2.bf16.msra.mxu0 %v530
    %721 = vmatprep.subr.bf16.mxu0 0
    %722 = vmatpush2.bf16.msra.mxu0 %v529
    %723 = vmatprep.subr.bf16.mxu0 0
    %724 = vmatpush2.bf16.msra.mxu0 %v528
    %725 = vmatprep.subr.bf16.mxu0 0
    %726 = vmatpush2.bf16.msra.mxu0 %v527
    %727 = vmatprep.mubr.bf16.mxu0 %v218
    %728 = vmatmul.mubr.bf16.gmra.mxu0 %v204
    %v729 = vpop.f32.mrf.mxu0
    %v730 = vadd.f32 %v690, %v729
    %v731 = vpop.f32.mrf.mxu0
    %v732 = vpop.f32.mrf.mxu0
    %v733 = vpop.f32.mrf.mxu0
    %734 = vdwg.mxu0
    %735 = vmatprep.subr.bf16.mxu0 0
    %736 = vmatpush1.bf16.msra.mxu0 %v542
    %737 = vmatprep.subr.bf16.mxu0 0
    %738 = vmatpush1.bf16.msra.mxu0 %v541
    %739 = vmatprep.subr.bf16.mxu0 0
    %740 = vmatpush1.bf16.msra.mxu0 %v540
    %741 = vmatprep.subr.bf16.mxu0 0
    %742 = vmatpush1.bf16.msra.mxu0 %v539
    %743 = vmatprep.subr.bf16.mxu0 0
    %744 = vmatpush1.bf16.msra.mxu0 %v538
    %745 = vmatprep.subr.bf16.mxu0 0
    %746 = vmatpush1.bf16.msra.mxu0 %v537
    %747 = vmatprep.subr.bf16.mxu0 0
    %748 = vmatpush1.bf16.msra.mxu0 %v536
    %749 = vmatprep.subr.bf16.mxu0 0
    %750 = vmatpush1.bf16.msra.mxu0 %v535
    %751 = vmatprep.subr.bf16.mxu0 0
    %752 = vmatpush2.bf16.msra.mxu0 %v550
    %753 = vmatprep.subr.bf16.mxu0 0
    %754 = vmatpush2.bf16.msra.mxu0 %v549
    %755 = vmatprep.subr.bf16.mxu0 0
    %756 = vmatpush2.bf16.msra.mxu0 %v548
    %757 = vmatprep.subr.bf16.mxu0 0
    %758 = vmatpush2.bf16.msra.mxu0 %v547
    %759 = vmatprep.subr.bf16.mxu0 0
    %760 = vmatpush2.bf16.msra.mxu0 %v546
    %761 = vmatprep.subr.bf16.mxu0 0
    %762 = vmatpush2.bf16.msra.mxu0 %v545
    %763 = vmatprep.subr.bf16.mxu0 0
    %764 = vmatpush2.bf16.msra.mxu0 %v544
    %765 = vmatprep.subr.bf16.mxu0 0
    %766 = vmatpush2.bf16.msra.mxu0 %v543
    %767 = vmatprep.mubr.bf16.mxu0 %v222
    %768 = vmatmul.mubr.bf16.gmra.mxu0 %v220
    %v769 = vpop.f32.mrf.mxu0
    %v770 = vadd.f32 %v730, %v769
    %v771 = vpop.f32.mrf.mxu0
    %v772 = vpop.f32.mrf.mxu0
    %v773 = vpop.f32.mrf.mxu0
    %774 = vdwg.mxu0
    %v775 = vmax.f32 %v770, 0.0
    %v776 = vpack.c.bf16 %v775, %v775
    %v777 = vld [vmem:[%s3] sm:$0xf]
    %v778 = vld [vmem:[%s3 + $0x4] sm:$0xf]
    %v779 = vld [vmem:[%s3 + $0x8] sm:$0xf]
    %v780 = vld [vmem:[%s3 + $0xc] sm:$0xf]
    %v781 = vld [vmem:[%s3 + $0x10] sm:$0xf]
    %v782 = vld [vmem:[%s3 + $0x14] sm:$0xf]
    %v783 = vld [vmem:[%s3 + $0x18] sm:$0xf]
    %v784 = vld [vmem:[%s3 + $0x1c] sm:$0xf]
    %v785 = vld [vmem:[%s3 + $0x20] sm:$0xf]
    %v786 = vld [vmem:[%s3 + $0x24] sm:$0xf]
    %v787 = vld [vmem:[%s3 + $0x28] sm:$0xf]
    %v788 = vld [vmem:[%s3 + $0x2c] sm:$0xf]
    %v789 = vld [vmem:[%s3 + $0x30] sm:$0xf]
    %v790 = vld [vmem:[%s3 + $0x34] sm:$0xf]
    %v791 = vld [vmem:[%s3 + $0x38] sm:$0xf]
    %v792 = vld [vmem:[%s3 + $0x3c] sm:$0xf]
    %v793 = vld [vmem:[%s4] sm:$0x1]
    %v795 = vlaneseq
    %v796 = vshrl.u32 %v795, 7
    %v797 = vsub.s32 0, %v796
    %v798 = vrot.slane %v793, %v797
    %v816 = vunpack.c.l.b16 %v777
    %v817 = vunpack.c.l.b16 %v778
    %v818 = vunpack.c.l.b16 %v779
    %v819 = vunpack.c.l.b16 %v780
    %v820 = vunpack.c.l.b16 %v781
    %v821 = vunpack.c.l.b16 %v782
    %v822 = vunpack.c.l.b16 %v783
    %v823 = vunpack.c.l.b16 %v784
    %v824 = vunpack.c.l.b16 %v785
    %v825 = vunpack.c.l.b16 %v786
    %v826 = vunpack.c.l.b16 %v787
    %v827 = vunpack.c.l.b16 %v788
    %v828 = vunpack.c.l.b16 %v789
    %v829 = vunpack.c.l.b16 %v790
    %v830 = vunpack.c.l.b16 %v791
    %v831 = vunpack.c.l.b16 %v792
    %v832 = vpack.c.b16 %v817, %v816
    %v833 = vpack.c.b16 %v819, %v818
    %v834 = vpack.c.b16 %v821, %v820
    %v835 = vpack.c.b16 %v823, %v822
    %v836 = vpack.c.b16 %v825, %v824
    %v837 = vpack.c.b16 %v827, %v826
    %v838 = vpack.c.b16 %v829, %v828
    %v839 = vpack.c.b16 %v831, %v830
    %848 = vmatprep.subr.bf16.mxu0 0
    %849 = vmatpush1.bf16.msra.mxu0 %v839
    %850 = vmatprep.subr.bf16.mxu0 0
    %851 = vmatpush1.bf16.msra.mxu0 %v838
    %852 = vmatprep.subr.bf16.mxu0 0
    %853 = vmatpush1.bf16.msra.mxu0 %v837
    %854 = vmatprep.subr.bf16.mxu0 0
    %855 = vmatpush1.bf16.msra.mxu0 %v836
    %856 = vmatprep.subr.bf16.mxu0 0
    %857 = vmatpush1.bf16.msra.mxu0 %v835
    %858 = vmatprep.subr.bf16.mxu0 0
    %859 = vmatpush1.bf16.msra.mxu0 %v834
    %860 = vmatprep.subr.bf16.mxu0 0
    %861 = vmatpush1.bf16.msra.mxu0 %v833
    %862 = vmatprep.subr.bf16.mxu0 0
    %863 = vmatpush1.bf16.msra.mxu0 %v832
    %864 = vmatprep.subr.bf16.mxu0 0
    %865 = vmatpush2.bf16.msra.mxu0 0
    %866 = vmatprep.subr.bf16.mxu0 0
    %867 = vmatpush2.bf16.msra.mxu0 0
    %868 = vmatprep.subr.bf16.mxu0 0
    %869 = vmatpush2.bf16.msra.mxu0 0
    %870 = vmatprep.subr.bf16.mxu0 0
    %871 = vmatpush2.bf16.msra.mxu0 0
    %872 = vmatprep.subr.bf16.mxu0 0
    %873 = vmatpush2.bf16.msra.mxu0 0
    %874 = vmatprep.subr.bf16.mxu0 0
    %875 = vmatpush2.bf16.msra.mxu0 0
    %876 = vmatprep.subr.bf16.mxu0 0
    %877 = vmatpush2.bf16.msra.mxu0 0
    %878 = vmatprep.subr.bf16.mxu0 0
    %879 = vmatpush2.bf16.msra.mxu0 0
    %880 = vmatprep.mubr.bf16.mxu0 0
    %881 = vmatmul.mubr.bf16.gmra.mxu0 %v776
    %v882 = vpop.f32.mrf.mxu0
    %v883 = vadd.f32 %v798, %v882
    %v884 = vpop.f32.mrf.mxu0
    %v885 = vpop.f32.mrf.mxu0
    %v886 = vpop.f32.mrf.mxu0
    %887 = vdwg.mxu0
    %v888 = vmax.f32 %v883, 0.0
    %v889 = vpack.c.bf16 %v888, %v888
    %v890 = vld [vmem:[%s5] sm:$0xf]
    %v891 = vld [vmem:[%s5 + $0x4] sm:$0xf]
    %v892 = vld [vmem:[%s5 + $0x8] sm:$0xf]
    %v893 = vld [vmem:[%s5 + $0xc] sm:$0xf]
    %v894 = vld [vmem:[%s5 + $0x10] sm:$0xf]
    %v895 = vld [vmem:[%s5 + $0x14] sm:$0xf]
    %v896 = vld [vmem:[%s5 + $0x18] sm:$0xf]
    %v897 = vld [vmem:[%s5 + $0x1c] sm:$0xf]
    %v898 = vld [vmem:[%s6] sm:$0x1]
    %v900 = vlaneseq
    %v901 = vshrl.u32 %v900, 7
    %v902 = vsub.s32 0, %v901
    %v903 = vrot.slane %v898, %v902
    %v913 = vunpack.c.l.b16 %v890
    %v914 = vunpack.c.l.b16 %v891
    %v915 = vunpack.c.l.b16 %v892
    %v916 = vunpack.c.l.b16 %v893
    %v917 = vunpack.c.l.b16 %v894
    %v918 = vunpack.c.l.b16 %v895
    %v919 = vunpack.c.l.b16 %v896
    %v920 = vunpack.c.l.b16 %v897
    %v921 = vpack.c.b16 %v914, %v913
    %v922 = vpack.c.b16 %v916, %v915
    %v923 = vpack.c.b16 %v918, %v917
    %v924 = vpack.c.b16 %v920, %v919
    %vm929 = vcmask 523264
    %v931 = vsel %vm929, %v889, 0
    %933 = vmatprep.subr.bf16.mxu0 0
    %934 = vmatpush1.bf16.msra.mxu0 0
    %935 = vmatprep.subr.bf16.mxu0 0
    %936 = vmatpush1.bf16.msra.mxu0 0
    %937 = vmatprep.subr.bf16.mxu0 0
    %938 = vmatpush1.bf16.msra.mxu0 0
    %939 = vmatprep.subr.bf16.mxu0 0
    %940 = vmatpush1.bf16.msra.mxu0 0
    %941 = vmatprep.subr.bf16.mxu0 0
    %942 = vmatpush1.bf16.msra.mxu0 %v924
    %943 = vmatprep.subr.bf16.mxu0 0
    %944 = vmatpush1.bf16.msra.mxu0 %v923
    %945 = vmatprep.subr.bf16.mxu0 0
    %946 = vmatpush1.bf16.msra.mxu0 %v922
    %947 = vmatprep.subr.bf16.mxu0 0
    %948 = vmatpush1.bf16.msra.mxu0 %v921
    %949 = vmatprep.subr.bf16.mxu0 0
    %950 = vmatpush2.bf16.msra.mxu0 0
    %951 = vmatprep.subr.bf16.mxu0 0
    %952 = vmatpush2.bf16.msra.mxu0 0
    %953 = vmatprep.subr.bf16.mxu0 0
    %954 = vmatpush2.bf16.msra.mxu0 0
    %955 = vmatprep.subr.bf16.mxu0 0
    %956 = vmatpush2.bf16.msra.mxu0 0
    %957 = vmatprep.subr.bf16.mxu0 0
    %958 = vmatpush2.bf16.msra.mxu0 0
    %959 = vmatprep.subr.bf16.mxu0 0
    %960 = vmatpush2.bf16.msra.mxu0 0
    %961 = vmatprep.subr.bf16.mxu0 0
    %962 = vmatpush2.bf16.msra.mxu0 0
    %963 = vmatprep.subr.bf16.mxu0 0
    %964 = vmatpush2.bf16.msra.mxu0 0
    %965 = vmatprep.mubr.bf16.mxu0 0
    %966 = vmatmul.mubr.bf16.gmra.mxu0 %v931
    %v967 = vpop.f32.mrf.mxu0
    %v968 = vadd.f32 %v903, %v967
    %v969 = vpop.f32.mrf.mxu0
    %v970 = vpop.f32.mrf.mxu0
    %v971 = vpop.f32.mrf.mxu0
    %972 = vdwg.mxu0
    %v973 = vmax.f32 %v968, 0.0
    %974 = vst [vmem:[#allocation4] sm:$0x3] %v973
    %v975 = vpack.c.bf16 %v973, %v973
    %v976 = vld [vmem:[%s7] sm:$0xf]
    %v977 = vld [vmem:[%s7 + $0x4] sm:$0xf]
    %v978 = vld [vmem:[%s7 + $0x8] sm:$0xf]
    %v979 = vld [vmem:[%s7 + $0xc] sm:$0xf]
    %v980 = vld [vmem:[%s7 + $0x10] sm:$0xf]
    %v981 = vld [vmem:[%s7 + $0x14] sm:$0xf]
    %v982 = vld [vmem:[%s7 + $0x18] sm:$0xf]
    %v983 = vld [vmem:[%s7 + $0x1c] sm:$0xf]
    %v984 = vld [vmem:[%s7 + $0x20] sm:$0xf]
    %v985 = vld [vmem:[%s7 + $0x24] sm:$0xf]
    %v986 = vld [vmem:[%s7 + $0x28] sm:$0xf]
    %v987 = vld [vmem:[%s7 + $0x2c] sm:$0xf]
    %v988 = vld [vmem:[%s7 + $0x30] sm:$0xf]
    %v989 = vld [vmem:[%s7 + $0x34] sm:$0xf]
    %v990 = vld [vmem:[%s7 + $0x38] sm:$0xf]
    %v991 = vld [vmem:[%s7 + $0x3c] sm:$0xf]
    %v992 = vld [vmem:[%s8] sm:$0x1]
    %v994 = vlaneseq
    %v995 = vshrl.u32 %v994, 7
    %v996 = vsub.s32 0, %v995
    %v997 = vrot.slane %v992, %v996
    %v1015 = vunpack.c.l.b16 %v976
    %v1016 = vunpack.c.l.b16 %v977
    %v1017 = vunpack.c.l.b16 %v978
    %v1018 = vunpack.c.l.b16 %v979
    %v1019 = vunpack.c.l.b16 %v980
    %v1020 = vunpack.c.l.b16 %v981
    %v1021 = vunpack.c.l.b16 %v982
    %v1022 = vunpack.c.l.b16 %v983
    %v1023 = vunpack.c.l.b16 %v984
    %v1024 = vunpack.c.l.b16 %v985
    %v1025 = vunpack.c.l.b16 %v986
    %v1026 = vunpack.c.l.b16 %v987
    %v1027 = vunpack.c.l.b16 %v988
    %v1028 = vunpack.c.l.b16 %v989
    %v1029 = vunpack.c.l.b16 %v990
    %v1030 = vunpack.c.l.b16 %v991
    %v1031 = vpack.c.b16 %v1016, %v1015
    %v1032 = vpack.c.b16 %v1018, %v1017
    %v1033 = vpack.c.b16 %v1020, %v1019
    %v1034 = vpack.c.b16 %v1022, %v1021
    %v1035 = vpack.c.b16 %v1024, %v1023
    %v1036 = vpack.c.b16 %v1026, %v1025
    %v1037 = vpack.c.b16 %v1028, %v1027
    %v1038 = vpack.c.b16 %v1030, %v1029
    %1047 = vmatprep.subr.bf16.mxu0 0
    %1048 = vmatpush1.bf16.msra.mxu0 %v1038
    %1049 = vmatprep.subr.bf16.mxu0 0
    %1050 = vmatpush1.bf16.msra.mxu0 %v1037
    %1051 = vmatprep.subr.bf16.mxu0 0
    %1052 = vmatpush1.bf16.msra.mxu0 %v1036
    %1053 = vmatprep.subr.bf16.mxu0 0
    %1054 = vmatpush1.bf16.msra.mxu0 %v1035
    %1055 = vmatprep.subr.bf16.mxu0 0
    %1056 = vmatpush1.bf16.msra.mxu0 %v1034
    %1057 = vmatprep.subr.bf16.mxu0 0
    %1058 = vmatpush1.bf16.msra.mxu0 %v1033
    %1059 = vmatprep.subr.bf16.mxu0 0
    %1060 = vmatpush1.bf16.msra.mxu0 %v1032
    %1061 = vmatprep.subr.bf16.mxu0 0
    %1062 = vmatpush1.bf16.msra.mxu0 %v1031
    %1063 = vmatprep.subr.bf16.mxu0 0
    %1064 = vmatpush2.bf16.msra.mxu0 0
    %1065 = vmatprep.subr.bf16.mxu0 0
    %1066 = vmatpush2.bf16.msra.mxu0 0
    %1067 = vmatprep.subr.bf16.mxu0 0
    %1068 = vmatpush2.bf16.msra.mxu0 0
    %1069 = vmatprep.subr.bf16.mxu0 0
    %1070 = vmatpush2.bf16.msra.mxu0 0
    %1071 = vmatprep.subr.bf16.mxu0 0
    %1072 = vmatpush2.bf16.msra.mxu0 0
    %1073 = vmatprep.subr.bf16.mxu0 0
    %1074 = vmatpush2.bf16.msra.mxu0 0
    %1075 = vmatprep.subr.bf16.mxu0 0
    %1076 = vmatpush2.bf16.msra.mxu0 0
    %1077 = vmatprep.subr.bf16.mxu0 0
    %1078 = vmatpush2.bf16.msra.mxu0 0
    %1079 = vmatprep.mubr.bf16.mxu0 0
    %1080 = vmatmul.mubr.bf16.gmra.mxu0 %v975
    %v1081 = vpop.f32.mrf.mxu0
    %v1082 = vadd.f32 %v997, %v1081
    %v1083 = vpop.f32.mrf.mxu0
    %v1084 = vpop.f32.mrf.mxu0
    %v1085 = vpop.f32.mrf.mxu0
    %1086 = vdwg.mxu0
    %1087 = vst [vmem:[#allocation2] sm:$0x3] %v1082
    // Predicated region
    $region38: #{mlp_forward.1} parent=1 // pred_check
      _
    $region39: #{mlp_forward.1} parent=1 // pred_check_branch
      %1089 = sbr.rel (0) target = $region41
    $region40: #{mlp_forward.1} parent=1 // pred_region
      %s1091 = ssub.s32 32, 32
      %1092 = vsyncadd [#allocation3], %s1091
      %s1094 = sshll.u32 [#allocation2], 4
      %s1095 = int_to_ptr.vmem [resolvable:$true] %s1094
      %1097 = dma.vmem_to_hbm [thread:$0]  %s1095, 32, %s9, [#allocation3]
    $region41: #{mlp_forward.1} parent=1 // pred_fallthru
      _
    // Predicated region
    $region42: #{mlp_forward.1} parent=1 // pred_check
      _
    $region43: #{mlp_forward.1} parent=1 // pred_check_branch
      %1099 = sbr.rel (0) target = $region45
    $region44: #{mlp_forward.1} parent=1 // pred_region
      %s1101 = ssub.s32 32, 32
      %1102 = vsyncadd [#allocation5], %s1101
      %s1104 = sshll.u32 [#allocation4], 4
      %s1105 = int_to_ptr.vmem [resolvable:$true] %s1104
      %1107 = dma.vmem_to_hbm [thread:$0]  %s1105, 32, %s10, [#allocation5]
    $region45: #{mlp_forward.1} parent=1 // pred_fallthru
      _
    // Predicated region
    $region46: #{mlp_forward.1} parent=1 // pred_check
      _
    $region47: #{mlp_forward.1} parent=1 // pred_check_branch
      %1109 = sbr.rel (0) target = $region49
    $region48: #{mlp_forward.1} parent=1 // pred_region
      %1110 = dma.done [#allocation3], 32
    $region49: #{mlp_forward.1} parent=1 // pred_fallthru
      _
    // Predicated region
    $region50: #{mlp_forward.1} parent=1 // pred_check
      _
    $region51: #{mlp_forward.1} parent=1 // pred_check_branch
      %1112 = sbr.rel (0) target = $region53
    $region52: #{mlp_forward.1} parent=1 // pred_region
      %1113 = dma.done [#allocation5], 32
    $region53: #{mlp_forward.1} parent=1 // pred_fallthru
      _
    %1114 = vsyncpa [#allocation3], 1
    %1115 = vsyncpa [#allocation5], 1

</llo_original>
